<compile_context>
chip_gen: v7x
topology: tpu7x:2x2x1
jax: 0.10.0
libtpu: 0.0.40
codegen_flags: <defaults>
</compile_context>

<pallas_src>
import functools

import jax
import jax.numpy as jnp
from jax.experimental import pallas as pl
from jax.experimental.pallas import tpu as pltpu

EPS = 1e-5
LANE = 128
SUBLANE = 8
_FUSED_VMEM_BUDGET = 24 * 2**20  # conservative (v7x has only 64 MiB physical VMEM)


def _round_up(x, m):
    return ((x + m - 1) // m) * m


def _vmem_limit(est_bytes):
    # Explicit scoped-VMEM limit: 2x the static estimate, clamped to [32, 48] MiB
    # so it is safe on v5e/v6e (128 MiB) and v7x (64 MiB) alike.
    return int(min(max(2 * est_bytes, 32 * 2**20), 48 * 2**20))


# ----------------------------------------------------------------------------
# Kernel bodies
# ----------------------------------------------------------------------------

def _normalize(h, stats, gb, n_rows):
    """BN normalize from packed (sum, sumsq) stats; gb rows = (gamma, beta)."""
    inv_n = jnp.float32(1.0 / n_rows)
    mean = stats[0:1, :] * inv_n
    var = jnp.maximum(stats[1:2, :] * inv_n - mean * mean, 0.0)
    return (h - mean) * jax.lax.rsqrt(var + EPS) * gb[0:1, :] + gb[1:2, :]


def _fused_kernel(x_ref, w1_ref, w2_ref, w3_ref, w4_ref, gb_ref, o_ref, *,
                  n_rows, compute_dtype):
    """Whole batch resident in VMEM: all 4 Linear+BN+act layers fused."""
    inv_n = jnp.float32(1.0 / n_rows)
    gb = gb_ref[...]                       # [8, C_pad]: rows 2l=gamma_l, 2l+1=beta_l
    w_refs = (w1_ref, w2_ref, w3_ref, w4_ref)

    h = x_ref[...]
    for l in range(4):
        # bf16 operands on the MXU, fp32 accumulation.
        h = jnp.dot(h.astype(compute_dtype), w_refs[l][...],
                    preferred_element_type=jnp.float32)
        # Single-pass batch statistics (bias-free: BN cancels the Linear bias).
        mean = jnp.sum(h, axis=0, keepdims=True) * inv_n
        var = jnp.maximum(jnp.sum(h * h, axis=0, keepdims=True) * inv_n
                          - mean * mean, 0.0)
        h = (h - mean) * jax.lax.rsqrt(var + EPS) * gb[2 * l:2 * l + 1, :] \
            + gb[2 * l + 1:2 * l + 2, :]
        h = jnp.maximum(h, 0.0) if l < 3 else jnp.tanh(h)
    o_ref[...] = h.astype(o_ref.dtype)


def _accumulate_stats(stats_ref, h, i, tile_n, n_rows, mask_rows):
    if mask_rows:  # exclude zero-padded batch rows from the statistics
        row = i * tile_n + jax.lax.broadcasted_iota(jnp.int32, h.shape, 0)
        h = jnp.where(row < n_rows, h, 0.0)
    stats_ref[0:1, :] += jnp.sum(h, axis=0, keepdims=True)
    stats_ref[1:2, :] += jnp.sum(h * h, axis=0, keepdims=True)


def _matmul_stats_kernel(x_ref, w_ref, h_ref, stats_ref, *,
                         n_rows, tile_n, mask_rows, compute_dtype):
    """Phase 1 of layer 1: tiled x @ W1, accumulate (sum, sumsq) per channel."""
    i = pl.program_id(0)

    @pl.when(i == 0)
    def _():
        stats_ref[...] = jnp.zeros_like(stats_ref)

    h = jnp.dot(x_ref[...].astype(compute_dtype), w_ref[...],
                preferred_element_type=jnp.float32)
    h_ref[...] = h
    _accumulate_stats(stats_ref, h, i, tile_n, n_rows, mask_rows)


def _bn_relu_matmul_stats_kernel(h_ref, stats_in_ref, gb_ref, w_ref,
                                 hn_ref, stats_out_ref, *,
                                 n_rows, tile_n, mask_rows, compute_dtype):
    """Fused: BN+ReLU of layer k (full-batch stats in) + matmul of layer k+1."""
    i = pl.program_id(0)

    @pl.when(i == 0)
    def _():
        stats_out_ref[...] = jnp.zeros_like(stats_out_ref)

    y = _normalize(h_ref[...], stats_in_ref[...], gb_ref[...], n_rows)
    y = jnp.maximum(y, 0.0)
    hn = jnp.dot(y.astype(compute_dtype), w_ref[...],
                 preferred_element_type=jnp.float32)
    hn_ref[...] = hn
    _accumulate_stats(stats_out_ref, hn, i, tile_n, n_rows, mask_rows)


def _bn_act_kernel(h_ref, stats_ref, gb_ref, o_ref, *, n_rows, act):
    """Final tiled BN + activation (tanh for layer 4)."""
    y = _normalize(h_ref[...], stats_ref[...], gb_ref[...], n_rows)
    y = jnp.tanh(y) if act == "tanh" else jnp.maximum(y, 0.0)
    o_ref[...] = y.astype(o_ref.dtype)


# ----------------------------------------------------------------------------
# Wrappers
# ----------------------------------------------------------------------------

def _prior_encoder_fused(x_pad, p, n_rows, c_pad, compute_dtype, vmem_limit):
    kernel = functools.partial(_fused_kernel, n_rows=n_rows,
                               compute_dtype=compute_dtype)
    vmem = pl.BlockSpec(memory_space=pltpu.MemorySpace.VMEM)
    return pl.pallas_call(
        kernel,
        out_shape=jax.ShapeDtypeStruct((x_pad.shape[0], c_pad), jnp.float32),
        in_specs=[vmem] * 6,
        out_specs=vmem,
        compiler_params=pltpu.CompilerParams(vmem_limit_bytes=vmem_limit),
    )(x_pad, p["w1"], p["w2"], p["w3"], p["w4"], p["gb"])


def _prior_encoder_tiled(x_pad, p, n_rows, c_pad, compute_dtype, tile_n,
                         vmem_limit):
    n_pad, cin_pad = x_pad.shape
    n_tiles = n_pad // tile_n
    mask_rows = n_pad != n_rows
    gb = p["gb"]

    acc_params = pltpu.CompilerParams(
        dimension_semantics=("arbitrary",), vmem_limit_bytes=vmem_limit)
    par_params = pltpu.CompilerParams(
        dimension_semantics=("parallel",), vmem_limit_bytes=vmem_limit)

    h_shape = jax.ShapeDtypeStruct((n_pad, c_pad), jnp.float32)
    stats_shape = jax.ShapeDtypeStruct((2, c_pad), jnp.float32)
    tile_spec = pl.BlockSpec((tile_n, c_pad), lambda i: (i, 0))
    rep2_spec = pl.BlockSpec((2, c_pad), lambda i: (0, 0))

    # Layer 1 matmul + stats accumulation (stats block resident -> "arbitrary").
    h, stats = pl.pallas_call(
        functools.partial(_matmul_stats_kernel, n_rows=n_rows, tile_n=tile_n,
                          mask_rows=mask_rows, compute_dtype=compute_dtype),
        grid=(n_tiles,),
        in_specs=[pl.BlockSpec((tile_n, cin_pad), lambda i: (i, 0)),
                  pl.BlockSpec((cin_pad, c_pad), lambda i: (0, 0))],
        out_specs=[tile_spec, rep2_spec],
        out_shape=[h_shape, stats_shape],
        compiler_params=acc_params,
    )(x_pad, p["w1"])

    # Layers 2..4 matmul, each fused with the previous layer's BN + ReLU.
    for k in range(3):
        h, stats = pl.pallas_call(
            functools.partial(_bn_relu_matmul_stats_kernel, n_rows=n_rows,
                              tile_n=tile_n, mask_rows=mask_rows,
                              compute_dtype=compute_dtype),
            grid=(n_tiles,),
            in_specs=[tile_spec, rep2_spec, rep2_spec,
                      pl.BlockSpec((c_pad, c_pad), lambda i: (0, 0))],
            out_specs=[tile_spec, rep2_spec],
            out_shape=[h_shape, stats_shape],
            compiler_params=acc_params,
        )(h, stats, gb[2 * k:2 * k + 2], p[f"w{k + 2}"])

    # Final BN + tanh (purely parallel over batch tiles).
    out = pl.pallas_call(
        functools.partial(_bn_act_kernel, n_rows=n_rows, act="tanh"),
        grid=(n_tiles,),
        in_specs=[tile_spec, rep2_spec, rep2_spec],
        out_specs=tile_spec,
        out_shape=h_shape,
        compiler_params=par_params,
    )(h, stats, gb[6:8])
    return out


def prepare_params(raw, use_bf16=True):
    """Pad features to lane multiples, pre-cast weights to the MXU dtype, pack
    gamma/beta into one [8, C_pad] array, and drop the Linear biases (they are
    exactly cancelled by the batch-statistics BN that follows each Linear)."""
    in_channels, out_channels = raw["w1"].shape
    cin_pad = _round_up(in_channels, LANE)
    c_pad = _round_up(out_channels, LANE)
    wdtype = jnp.bfloat16 if use_bf16 else jnp.float32

    p = {"in_channels": in_channels, "out_channels": out_channels,
         "cin_pad": cin_pad, "c_pad": c_pad, "compute_dtype": wdtype}
    for i in range(1, 5):
        w = raw[f"w{i}"]
        rows = cin_pad if i == 1 else c_pad
        wp = jnp.zeros((rows, c_pad), jnp.float32).at[:w.shape[0], :w.shape[1]].set(w)
        p[f"w{i}"] = wp.astype(wdtype)

    gb = jnp.zeros((8, c_pad), jnp.float32)
    for l in range(4):
        gb = gb.at[2 * l, :out_channels].set(raw[f"g{l + 1}"].reshape(-1))
        gb = gb.at[2 * l + 1, :out_channels].set(raw[f"be{l + 1}"].reshape(-1))
    p["gb"] = gb
    return p


def prior_encoder(x, prepared, *, tile_n=512, force_tiled=False):
    """x: [N, in_channels]; prepared: output of prepare_params()."""
    n, cin = x.shape
    assert cin == prepared["in_channels"]
    cin_pad, c_pad = prepared["cin_pad"], prepared["c_pad"]
    out_channels = prepared["out_channels"]
    compute_dtype = prepared["compute_dtype"]
    wbytes = jnp.dtype(compute_dtype).itemsize

    x = x.astype(jnp.float32)
    x_pad = jnp.pad(x, ((0, 0), (0, cin_pad - cin))) if cin_pad != cin else x

    # Static VMEM estimate for the fused (whole-batch resident) path.
    est = ((cin_pad + 3 * c_pad) * c_pad * wbytes
           + 4 * n * (cin_pad + 6 * c_pad) + 4 * 8 * c_pad)
    use_fused = (not force_tiled) and est <= _FUSED_VMEM_BUDGET

    if use_fused:
        out = _prior_encoder_fused(x_pad, prepared, n, c_pad, compute_dtype,
                                   vmem_limit=_vmem_limit(est))
    else:
        tile_n = max(_round_up(tile_n, SUBLANE), SUBLANE)
        n_pad = _round_up(n, tile_n)
        if n_pad != n:
            x_pad = jnp.pad(x_pad, ((0, n_pad - n), (0, 0)))
        est_t = (max(cin_pad, c_pad) * c_pad * wbytes
                 + 4 * 4 * tile_n * (cin_pad + c_pad) + 4 * 16 * c_pad)
        out = _prior_encoder_tiled(x_pad, prepared, n, c_pad, compute_dtype,
                                   tile_n, vmem_limit=_vmem_limit(est_t))
    return out[:n, :out_channels]


# ----------------------------------------------------------------------------
# Parameter init and pure-JAX references
# ----------------------------------------------------------------------------

def init_params(key, in_channels, out_channels):
    """Raw parameters. Linear weights stored as [C_in, C_out]; gamma/beta are
    random here just to exercise the affine path (PyTorch default is 1/0)."""
    keys = jax.random.split(key, 16)
    p = {}
    dims = [(in_channels, out_channels)] + [(out_channels, out_channels)] * 3
    for i, (cin, cout) in enumerate(dims, start=1):
        k = keys[4 * (i - 1):4 * i]
        bound = 1.0 / (cin ** 0.5)
        p[f"w{i}"] = jax.random.uniform(k[0], (cin, cout), jnp.float32, -bound, bound)
        p[f"b{i}"] = jax.random.uniform(k[1], (cout,), jnp.float32, -bound, bound)
        p[f"g{i}"] = jax.random.uniform(k[2], (cout,), jnp.float32, 0.5, 1.5)
        p[f"be{i}"] = jax.random.uniform(k[3], (cout,), jnp.float32, -0.5, 0.5)
    return p


def prior_encoder_ref_fp32(x, raw):
    """Original-module semantics: fp32, bias included, two-pass BN stats."""
    h = x.astype(jnp.float32)
    for i in range(1, 5):
        h = jnp.dot(h, raw[f"w{i}"], precision=jax.lax.Precision.HIGHEST) \
            + raw[f"b{i}"].reshape(1, -1)
        mean = jnp.mean(h, axis=0, keepdims=True)
        var = jnp.mean((h - mean) ** 2, axis=0, keepdims=True)
        h = (h - mean) * jax.lax.rsqrt(var + EPS) * raw[f"g{i}"].reshape(1, -1) \
            + raw[f"be{i}"].reshape(1, -1)
        h = jnp.maximum(h, 0.0) if i < 4 else jnp.tanh(h)
    return h


def prior_encoder_ref_matched(x, raw, compute_dtype):
    """Mirrors the kernel math (no bias, cast operands, single-pass stats)."""
    h = x.astype(jnp.float32)
    inv_n = jnp.float32(1.0 / x.shape[0])
    for i in range(1, 5):
        w = raw[f"w{i}"].astype(compute_dtype)
        h = jnp.dot(h.astype(compute_dtype), w, preferred_element_type=jnp.float32)
        mean = jnp.sum(h, axis=0, keepdims=True) * inv_n
        var = jnp.maximum(jnp.sum(h * h, axis=0, keepdims=True) * inv_n
                          - mean * mean, 0.0)
        h = (h - mean) * jax.lax.rsqrt(var + EPS) * raw[f"g{i}"].reshape(1, -1) \
            + raw[f"be{i}"].reshape(1, -1)
        h = jnp.maximum(h, 0.0) if i < 4 else jnp.tanh(h)
    return h


if __name__ == "__main__":
    key = jax.random.PRNGKey(0)
    k_x, k_p = jax.random.split(key)

    # PriorEncoder as used in PointCapsNet: prior_size=10 -> prior_vec_size=64.
    N, IN_CH, OUT_CH = 20, 10, 64
    x = jax.random.normal(k_x, (N, IN_CH), jnp.float32)
    raw = init_params(k_p, IN_CH, OUT_CH)

    # 1) Production path: fused whole-batch kernel, bf16 MXU operands.
    prep_bf16 = prepare_params(raw, use_bf16=True)
    out = jax.block_until_ready(prior_encoder(x, prep_bf16))
    ref_m = prior_encoder_ref_matched(x, raw, jnp.bfloat16)
    assert out.shape == (N, OUT_CH)
    assert jnp.allclose(out, ref_m, atol=2e-3, rtol=2e-3), \
        float(jnp.max(jnp.abs(out - ref_m)))

    # 2) fp32 mode vs. the original (bias-included) module forward: shows the
    #    bias-drop + single-pass-stats rewrites preserve the module semantics.
    prep_f32 = prepare_params(raw, use_bf16=False)
    out32 = jax.block_until_ready(prior_encoder(x, prep_f32))
    ref32 = prior_encoder_ref_fp32(x, raw)
    assert jnp.allclose(out32, ref32, atol=2e-2, rtol=2e-2), \
        float(jnp.max(jnp.abs(out32 - ref32)))

    # 3) N-tiled two-phase path (auto-selected for large batches), exercised
    #    here with a tiny tile so masking + stats accumulation are tested.
    out_t = jax.block_until_ready(
        prior_encoder(x, prep_bf16, tile_n=8, force_tiled=True))
    assert jnp.allclose(out_t, ref_m, atol=2e-3, rtol=2e-3), \
        float(jnp.max(jnp.abs(out_t - ref_m)))

    print("KERNEL_OK")
</pallas_src>

<mosaic_0001>
module attributes {stable_mosaic.version = 11 : i64} {
  func.func @_fused_kernel(%arg0: memref<20x128xf32, #tpu.memory_space<vmem>>, %arg1: memref<128x128xbf16, #tpu.memory_space<vmem>>, %arg2: memref<128x128xbf16, #tpu.memory_space<vmem>>, %arg3: memref<128x128xbf16, #tpu.memory_space<vmem>>, %arg4: memref<128x128xbf16, #tpu.memory_space<vmem>>, %arg5: memref<8x128xf32, #tpu.memory_space<vmem>>, %arg6: memref<20x128xf32, #tpu.memory_space<vmem>>) attributes {dimension_semantics = [], scalar_prefetch = 0 : i64, scratch_operands = 0 : i64, tpu.core_type = #tpu.core_type<tc>} {
    %c0 = arith.constant 0 : index
    %c0_0 = arith.constant 0 : index
    %0 = vector.load %arg5[%c0, %c0_0] : memref<8x128xf32, #tpu.memory_space<vmem>>, vector<8x128xf32>
    %c0_1 = arith.constant 0 : index
    %c0_2 = arith.constant 0 : index
    %1 = vector.load %arg0[%c0_1, %c0_2] : memref<20x128xf32, #tpu.memory_space<vmem>>, vector<20x128xf32>
    %2 = arith.truncf %1 : vector<20x128xf32> to vector<20x128xbf16>
    %c0_3 = arith.constant 0 : index
    %c0_4 = arith.constant 0 : index
    %3 = vector.load %arg1[%c0_3, %c0_4] : memref<128x128xbf16, #tpu.memory_space<vmem>>, vector<128x128xbf16>
    %cst = arith.constant dense<0.000000e+00> : vector<20x128xf32>
    %4 = tpu.matmul %2, %3, %cst {dimension_numbers = #tpu.dot_dimension_numbers<[1], [0], [0], [1], [0, 0, 1, 1], [], []>} : vector<20x128xbf16>, vector<128x128xbf16>, vector<20x128xf32> -> vector<20x128xf32>
    %cst_5 = arith.constant dense<0.000000e+00> : vector<128xf32>
    %5 = vector.multi_reduction <add>, %4, %cst_5 [0] : vector<20x128xf32> to vector<128xf32>
    %6 = vector.shape_cast %5 : vector<128xf32> to vector<1x128xf32>
    %cst_6 = arith.constant 5.000000e-02 : f32
    %7 = vector.broadcast %cst_6 : f32 to vector<1x128xf32>
    %8 = arith.mulf %6, %7 : vector<1x128xf32>
    %9 = arith.mulf %4, %4 : vector<20x128xf32>
    %cst_7 = arith.constant dense<0.000000e+00> : vector<128xf32>
    %10 = vector.multi_reduction <add>, %9, %cst_7 [0] : vector<20x128xf32> to vector<128xf32>
    %11 = vector.shape_cast %10 : vector<128xf32> to vector<1x128xf32>
    %cst_8 = arith.constant 5.000000e-02 : f32
    %12 = vector.broadcast %cst_8 : f32 to vector<1x128xf32>
    %13 = arith.mulf %11, %12 : vector<1x128xf32>
    %14 = arith.mulf %8, %8 : vector<1x128xf32>
    %15 = arith.subf %13, %14 : vector<1x128xf32>
    %cst_9 = arith.constant 0.000000e+00 : f32
    %16 = vector.broadcast %cst_9 : f32 to vector<1x128xf32>
    %17 = arith.maximumf %15, %16 : vector<1x128xf32>
    %18 = vector.broadcast %8 : vector<1x128xf32> to vector<20x128xf32>
    %19 = arith.subf %4, %18 : vector<20x128xf32>
    %cst_10 = arith.constant 9.99999974E-6 : f32
    %20 = vector.broadcast %cst_10 : f32 to vector<1x128xf32>
    %21 = arith.addf %17, %20 : vector<1x128xf32>
    %22 = math.rsqrt %21 : vector<1x128xf32>
    %23 = vector.broadcast %22 : vector<1x128xf32> to vector<20x128xf32>
    %24 = arith.mulf %19, %23 : vector<20x128xf32>
    %25 = vector.extract_strided_slice %0 {offsets = [0, 0], sizes = [1, 128], strides = [1, 1]} : vector<8x128xf32> to vector<1x128xf32>
    %26 = vector.broadcast %25 : vector<1x128xf32> to vector<20x128xf32>
    %27 = arith.mulf %24, %26 : vector<20x128xf32>
    %28 = vector.extract_strided_slice %0 {offsets = [1, 0], sizes = [1, 128], strides = [1, 1]} : vector<8x128xf32> to vector<1x128xf32>
    %29 = vector.broadcast %28 : vector<1x128xf32> to vector<20x128xf32>
    %30 = arith.addf %27, %29 : vector<20x128xf32>
    %cst_11 = arith.constant 0.000000e+00 : f32
    %31 = vector.broadcast %cst_11 : f32 to vector<20x128xf32>
    %32 = arith.maximumf %30, %31 : vector<20x128xf32>
    %33 = arith.truncf %32 : vector<20x128xf32> to vector<20x128xbf16>
    %c0_12 = arith.constant 0 : index
    %c0_13 = arith.constant 0 : index
    %34 = vector.load %arg2[%c0_12, %c0_13] : memref<128x128xbf16, #tpu.memory_space<vmem>>, vector<128x128xbf16>
    %cst_14 = arith.constant dense<0.000000e+00> : vector<20x128xf32>
    %35 = tpu.matmul %33, %34, %cst_14 {dimension_numbers = #tpu.dot_dimension_numbers<[1], [0], [0], [1], [0, 0, 1, 1], [], []>} : vector<20x128xbf16>, vector<128x128xbf16>, vector<20x128xf32> -> vector<20x128xf32>
    %cst_15 = arith.constant dense<0.000000e+00> : vector<128xf32>
    %36 = vector.multi_reduction <add>, %35, %cst_15 [0] : vector<20x128xf32> to vector<128xf32>
    %37 = vector.shape_cast %36 : vector<128xf32> to vector<1x128xf32>
    %cst_16 = arith.constant 5.000000e-02 : f32
    %38 = vector.broadcast %cst_16 : f32 to vector<1x128xf32>
    %39 = arith.mulf %37, %38 : vector<1x128xf32>
    %40 = arith.mulf %35, %35 : vector<20x128xf32>
    %cst_17 = arith.constant dense<0.000000e+00> : vector<128xf32>
    %41 = vector.multi_reduction <add>, %40, %cst_17 [0] : vector<20x128xf32> to vector<128xf32>
    %42 = vector.shape_cast %41 : vector<128xf32> to vector<1x128xf32>
    %cst_18 = arith.constant 5.000000e-02 : f32
    %43 = vector.broadcast %cst_18 : f32 to vector<1x128xf32>
    %44 = arith.mulf %42, %43 : vector<1x128xf32>
    %45 = arith.mulf %39, %39 : vector<1x128xf32>
    %46 = arith.subf %44, %45 : vector<1x128xf32>
    %cst_19 = arith.constant 0.000000e+00 : f32
    %47 = vector.broadcast %cst_19 : f32 to vector<1x128xf32>
    %48 = arith.maximumf %46, %47 : vector<1x128xf32>
    %49 = vector.broadcast %39 : vector<1x128xf32> to vector<20x128xf32>
    %50 = arith.subf %35, %49 : vector<20x128xf32>
    %cst_20 = arith.constant 9.99999974E-6 : f32
    %51 = vector.broadcast %cst_20 : f32 to vector<1x128xf32>
    %52 = arith.addf %48, %51 : vector<1x128xf32>
    %53 = math.rsqrt %52 : vector<1x128xf32>
    %54 = vector.broadcast %53 : vector<1x128xf32> to vector<20x128xf32>
    %55 = arith.mulf %50, %54 : vector<20x128xf32>
    %56 = vector.extract_strided_slice %0 {offsets = [2, 0], sizes = [1, 128], strides = [1, 1]} : vector<8x128xf32> to vector<1x128xf32>
    %57 = vector.broadcast %56 : vector<1x128xf32> to vector<20x128xf32>
    %58 = arith.mulf %55, %57 : vector<20x128xf32>
    %59 = vector.extract_strided_slice %0 {offsets = [3, 0], sizes = [1, 128], strides = [1, 1]} : vector<8x128xf32> to vector<1x128xf32>
    %60 = vector.broadcast %59 : vector<1x128xf32> to vector<20x128xf32>
    %61 = arith.addf %58, %60 : vector<20x128xf32>
    %cst_21 = arith.constant 0.000000e+00 : f32
    %62 = vector.broadcast %cst_21 : f32 to vector<20x128xf32>
    %63 = arith.maximumf %61, %62 : vector<20x128xf32>
    %64 = arith.truncf %63 : vector<20x128xf32> to vector<20x128xbf16>
    %c0_22 = arith.constant 0 : index
    %c0_23 = arith.constant 0 : index
    %65 = vector.load %arg3[%c0_22, %c0_23] : memref<128x128xbf16, #tpu.memory_space<vmem>>, vector<128x128xbf16>
    %cst_24 = arith.constant dense<0.000000e+00> : vector<20x128xf32>
    %66 = tpu.matmul %64, %65, %cst_24 {dimension_numbers = #tpu.dot_dimension_numbers<[1], [0], [0], [1], [0, 0, 1, 1], [], []>} : vector<20x128xbf16>, vector<128x128xbf16>, vector<20x128xf32> -> vector<20x128xf32>
    %cst_25 = arith.constant dense<0.000000e+00> : vector<128xf32>
    %67 = vector.multi_reduction <add>, %66, %cst_25 [0] : vector<20x128xf32> to vector<128xf32>
    %68 = vector.shape_cast %67 : vector<128xf32> to vector<1x128xf32>
    %cst_26 = arith.constant 5.000000e-02 : f32
    %69 = vector.broadcast %cst_26 : f32 to vector<1x128xf32>
    %70 = arith.mulf %68, %69 : vector<1x128xf32>
    %71 = arith.mulf %66, %66 : vector<20x128xf32>
    %cst_27 = arith.constant dense<0.000000e+00> : vector<128xf32>
    %72 = vector.multi_reduction <add>, %71, %cst_27 [0] : vector<20x128xf32> to vector<128xf32>
    %73 = vector.shape_cast %72 : vector<128xf32> to vector<1x128xf32>
    %cst_28 = arith.constant 5.000000e-02 : f32
    %74 = vector.broadcast %cst_28 : f32 to vector<1x128xf32>
    %75 = arith.mulf %73, %74 : vector<1x128xf32>
    %76 = arith.mulf %70, %70 : vector<1x128xf32>
    %77 = arith.subf %75, %76 : vector<1x128xf32>
    %cst_29 = arith.constant 0.000000e+00 : f32
    %78 = vector.broadcast %cst_29 : f32 to vector<1x128xf32>
    %79 = arith.maximumf %77, %78 : vector<1x128xf32>
    %80 = vector.broadcast %70 : vector<1x128xf32> to vector<20x128xf32>
    %81 = arith.subf %66, %80 : vector<20x128xf32>
    %cst_30 = arith.constant 9.99999974E-6 : f32
    %82 = vector.broadcast %cst_30 : f32 to vector<1x128xf32>
    %83 = arith.addf %79, %82 : vector<1x128xf32>
    %84 = math.rsqrt %83 : vector<1x128xf32>
    %85 = vector.broadcast %84 : vector<1x128xf32> to vector<20x128xf32>
    %86 = arith.mulf %81, %85 : vector<20x128xf32>
    %87 = vector.extract_strided_slice %0 {offsets = [4, 0], sizes = [1, 128], strides = [1, 1]} : vector<8x128xf32> to vector<1x128xf32>
    %88 = vector.broadcast %87 : vector<1x128xf32> to vector<20x128xf32>
    %89 = arith.mulf %86, %88 : vector<20x128xf32>
    %90 = vector.extract_strided_slice %0 {offsets = [5, 0], sizes = [1, 128], strides = [1, 1]} : vector<8x128xf32> to vector<1x128xf32>
    %91 = vector.broadcast %90 : vector<1x128xf32> to vector<20x128xf32>
    %92 = arith.addf %89, %91 : vector<20x128xf32>
    %cst_31 = arith.constant 0.000000e+00 : f32
    %93 = vector.broadcast %cst_31 : f32 to vector<20x128xf32>
    %94 = arith.maximumf %92, %93 : vector<20x128xf32>
    %95 = arith.truncf %94 : vector<20x128xf32> to vector<20x128xbf16>
    %c0_32 = arith.constant 0 : index
    %c0_33 = arith.constant 0 : index
    %96 = vector.load %arg4[%c0_32, %c0_33] : memref<128x128xbf16, #tpu.memory_space<vmem>>, vector<128x128xbf16>
    %cst_34 = arith.constant dense<0.000000e+00> : vector<20x128xf32>
    %97 = tpu.matmul %95, %96, %cst_34 {dimension_numbers = #tpu.dot_dimension_numbers<[1], [0], [0], [1], [0, 0, 1, 1], [], []>} : vector<20x128xbf16>, vector<128x128xbf16>, vector<20x128xf32> -> vector<20x128xf32>
    %cst_35 = arith.constant dense<0.000000e+00> : vector<128xf32>
    %98 = vector.multi_reduction <add>, %97, %cst_35 [0] : vector<20x128xf32> to vector<128xf32>
    %99 = vector.shape_cast %98 : vector<128xf32> to vector<1x128xf32>
    %cst_36 = arith.constant 5.000000e-02 : f32
    %100 = vector.broadcast %cst_36 : f32 to vector<1x128xf32>
    %101 = arith.mulf %99, %100 : vector<1x128xf32>
    %102 = arith.mulf %97, %97 : vector<20x128xf32>
    %cst_37 = arith.constant dense<0.000000e+00> : vector<128xf32>
    %103 = vector.multi_reduction <add>, %102, %cst_37 [0] : vector<20x128xf32> to vector<128xf32>
    %104 = vector.shape_cast %103 : vector<128xf32> to vector<1x128xf32>
    %cst_38 = arith.constant 5.000000e-02 : f32
    %105 = vector.broadcast %cst_38 : f32 to vector<1x128xf32>
    %106 = arith.mulf %104, %105 : vector<1x128xf32>
    %107 = arith.mulf %101, %101 : vector<1x128xf32>
    %108 = arith.subf %106, %107 : vector<1x128xf32>
    %cst_39 = arith.constant 0.000000e+00 : f32
    %109 = vector.broadcast %cst_39 : f32 to vector<1x128xf32>
    %110 = arith.maximumf %108, %109 : vector<1x128xf32>
    %111 = vector.broadcast %101 : vector<1x128xf32> to vector<20x128xf32>
    %112 = arith.subf %97, %111 : vector<20x128xf32>
    %cst_40 = arith.constant 9.99999974E-6 : f32
    %113 = vector.broadcast %cst_40 : f32 to vector<1x128xf32>
    %114 = arith.addf %110, %113 : vector<1x128xf32>
    %115 = math.rsqrt %114 : vector<1x128xf32>
    %116 = vector.broadcast %115 : vector<1x128xf32> to vector<20x128xf32>
    %117 = arith.mulf %112, %116 : vector<20x128xf32>
    %118 = vector.extract_strided_slice %0 {offsets = [6, 0], sizes = [1, 128], strides = [1, 1]} : vector<8x128xf32> to vector<1x128xf32>
    %119 = vector.broadcast %118 : vector<1x128xf32> to vector<20x128xf32>
    %120 = arith.mulf %117, %119 : vector<20x128xf32>
    %121 = vector.extract_strided_slice %0 {offsets = [7, 0], sizes = [1, 128], strides = [1, 1]} : vector<8x128xf32> to vector<1x128xf32>
    %122 = vector.broadcast %121 : vector<1x128xf32> to vector<20x128xf32>
    %123 = arith.addf %120, %122 : vector<20x128xf32>
    %124 = math.tanh %123 : vector<20x128xf32>
    %c0_41 = arith.constant 0 : index
    %c0_42 = arith.constant 0 : index
    %125 = vector.load %arg6[%c0_41, %c0_42] : memref<20x128xf32, #tpu.memory_space<vmem>>, vector<20x128xf32>
    tpu.vector_store %arg6[%c0_41, %c0_42], %124 {strides = array<i32>} : memref<20x128xf32, #tpu.memory_space<vmem>>, vector<20x128xf32>,
    return
  }
}

</mosaic_0001>

<llo_original>
// kernel: tpu_custom_call.1
$region0: #{tpu_custom_call.1}
  #allocation0 [shape = 'u32[]', space=smem, size = 0x4, offset = 0x4, fixed_abs, tag = 'smem constant byte address 0x4 - core index']
  #allocation1 [shape = 'u32[144,128]{1,0:T(1,128)}', space=vmem, size = 0x12000, scoped, tag = 'internal scratch']
  %s0 = inlined_call_operand.hbm [shape: f32[20,128], index: 0, kind: input, shape index: {}]
  %s1 = inlined_call_operand.hbm [shape: bf16[128,128], index: 1, kind: input, shape index: {}]
  %s2 = inlined_call_operand.hbm [shape: bf16[128,128], index: 2, kind: input, shape index: {}]
  %s3 = inlined_call_operand.hbm [shape: bf16[128,128], index: 3, kind: input, shape index: {}]
  %s4 = inlined_call_operand.hbm [shape: bf16[128,128], index: 4, kind: input, shape index: {}]
  %s5 = inlined_call_operand.vmem [shape: f32[8,128], index: 5, kind: input, shape index: {}]
  %s6 = inlined_call_operand.hbm [shape: f32[20,128], index: 6, kind: output, shape index: {}]
  %s7 = sld [smem:[#allocation0]]
  $region54: #{tpu_custom_call.1} parent=0
    _
  %s9 = ssub.s32 1, %s7
  %s10 = scalar_select 0, %s9, %s7
  $region1: #{tpu_custom_call.1} parent=0
    #allocation2 [shape = 'u8[12288]{0}', space=vmem, size = 0x3000, scoped, tag = 'input window, operand 0, single buffered']
    #allocation3 [shape = 's32[1]{0}', space=sflag, size = 0x4, scoped, tag = 'scoped memory for tpu_custom_call.1']
    #allocation4 [shape = 's32[1]{0}', space=sflag, size = 0x4, scoped, tag = 'scoped memory for tpu_custom_call.1']
    #allocation5 [shape = 'u8[32768]{0}', space=vmem, size = 0x8000, scoped, tag = 'input window, operand 1, single buffered']
    #allocation6 [shape = 's32[1]{0}', space=sflag, size = 0x4, scoped, tag = 'scoped memory for tpu_custom_call.1']
    #allocation7 [shape = 'u8[32768]{0}', space=vmem, size = 0x8000, scoped, tag = 'input window, operand 2, single buffered']
    #allocation8 [shape = 'u8[32768]{0}', space=vmem, size = 0x8000, scoped, tag = 'input window, operand 3, single buffered']
    #allocation9 [shape = 's32[1]{0}', space=sflag, size = 0x4, scoped, tag = 'scoped memory for tpu_custom_call.1']
    #allocation10 [shape = 'u8[32768]{0}', space=vmem, size = 0x8000, scoped, tag = 'input window, operand 4, single buffered']
    #allocation11 [shape = 'u8[12288]{0}', space=vmem, size = 0x3000, scoped, tag = 'output window, operand 0, single buffered']
    %11 = vsyncpa [#allocation3], 0
    %12 = vsyncpa [#allocation6], 0
    %13 = vsyncpa [#allocation9], 0
    %14 = vsyncpa [#allocation4], 0
    // Predicated region
    $region2: #{tpu_custom_call.1} parent=1 // pred_check
      _
    $region3: #{tpu_custom_call.1} parent=1 // pred_check_branch
      %16 = sbr.rel (0) target = $region5
    $region4: #{tpu_custom_call.1} parent=1 // pred_region
      %s18 = ssub.s32 384, 384
      %19 = vsyncadd [#allocation3], %s18
      %s20 = sshll.u32 [#allocation2], 4
      %s21 = int_to_ptr.vmem [resolvable:$true] %s20
      %26 = dma.hbm_to_vmem [thread:$0]  %s0, 384, %s21, [#allocation3], 128, 128, 8
    $region5: #{tpu_custom_call.1} parent=1 // pred_fallthru
      _
    // Predicated region
    $region6: #{tpu_custom_call.1} parent=1 // pred_check
      _
    $region7: #{tpu_custom_call.1} parent=1 // pred_check_branch
      %28 = sbr.rel (0) target = $region9
    $region8: #{tpu_custom_call.1} parent=1 // pred_region
      %s30 = ssub.s32 1024, 1024
      %31 = vsyncadd [#allocation6], %s30
      %s32 = sshll.u32 [#allocation5], 4
      %s33 = int_to_ptr.vmem [resolvable:$true] %s32
      %38 = dma.hbm_to_vmem [thread:$0]  %s1, 1024, %s33, [#allocation6], 64, 64, 4
    $region9: #{tpu_custom_call.1} parent=1 // pred_fallthru
      _
    // Predicated region
    $region10: #{tpu_custom_call.1} parent=1 // pred_check
      _
    $region11: #{tpu_custom_call.1} parent=1 // pred_check_branch
      %40 = sbr.rel (0) target = $region13
    $region12: #{tpu_custom_call.1} parent=1 // pred_region
      %s42 = ssub.s32 1024, 1024
      %43 = vsyncadd [#allocation6], %s42
      %s44 = sshll.u32 [#allocation7], 4
      %s45 = int_to_ptr.vmem [resolvable:$true] %s44
      %50 = dma.hbm_to_vmem [thread:$0]  %s2, 1024, %s45, [#allocation6], 64, 64, 4
    $region13: #{tpu_custom_call.1} parent=1 // pred_fallthru
      _
    // Predicated region
    $region14: #{tpu_custom_call.1} parent=1 // pred_check
      _
    $region15: #{tpu_custom_call.1} parent=1 // pred_check_branch
      %52 = sbr.rel (0) target = $region17
    $region16: #{tpu_custom_call.1} parent=1 // pred_region
      %s54 = ssub.s32 1024, 1024
      %55 = vsyncadd [#allocation9], %s54
      %s56 = sshll.u32 [#allocation8], 4
      %s57 = int_to_ptr.vmem [resolvable:$true] %s56
      %62 = dma.hbm_to_vmem [thread:$0]  %s3, 1024, %s57, [#allocation9], 64, 64, 4
    $region17: #{tpu_custom_call.1} parent=1 // pred_fallthru
      _
    // Predicated region
    $region18: #{tpu_custom_call.1} parent=1 // pred_check
      _
    $region19: #{tpu_custom_call.1} parent=1 // pred_check_branch
      %64 = sbr.rel (0) target = $region21
    $region20: #{tpu_custom_call.1} parent=1 // pred_region
      %s66 = ssub.s32 1024, 1024
      %67 = vsyncadd [#allocation9], %s66
      %s68 = sshll.u32 [#allocation10], 4
      %s69 = int_to_ptr.vmem [resolvable:$true] %s68
      %74 = dma.hbm_to_vmem [thread:$0]  %s4, 1024, %s69, [#allocation9], 64, 64, 4
    $region21: #{tpu_custom_call.1} parent=1 // pred_fallthru
      _
    // Predicated region
    $region22: #{tpu_custom_call.1} parent=1 // pred_check
      _
    $region23: #{tpu_custom_call.1} parent=1 // pred_check_branch
      %76 = sbr.rel (0) target = $region25
    $region24: #{tpu_custom_call.1} parent=1 // pred_region
      _
    $region25: #{tpu_custom_call.1} parent=1 // pred_fallthru
      _
    // Predicated region
    $region26: #{tpu_custom_call.1} parent=1 // pred_check
      _
    $region27: #{tpu_custom_call.1} parent=1 // pred_check_branch
      %78 = sbr.rel (0) target = $region29
    $region28: #{tpu_custom_call.1} parent=1 // pred_region
      %79 = dma.done [#allocation3], 384
    $region29: #{tpu_custom_call.1} parent=1 // pred_fallthru
      _
    // Predicated region
    $region30: #{tpu_custom_call.1} parent=1 // pred_check
      _
    $region31: #{tpu_custom_call.1} parent=1 // pred_check_branch
      %81 = sbr.rel (0) target = $region33
    $region32: #{tpu_custom_call.1} parent=1 // pred_region
      %82 = dma.done [#allocation6], 1024
    $region33: #{tpu_custom_call.1} parent=1 // pred_fallthru
      _
    // Predicated region
    $region34: #{tpu_custom_call.1} parent=1 // pred_check
      _
    $region35: #{tpu_custom_call.1} parent=1 // pred_check_branch
      %84 = sbr.rel (0) target = $region37
    $region36: #{tpu_custom_call.1} parent=1 // pred_region
      %85 = dma.done [#allocation6], 1024
    $region37: #{tpu_custom_call.1} parent=1 // pred_fallthru
      _
    // Predicated region
    $region38: #{tpu_custom_call.1} parent=1 // pred_check
      _
    $region39: #{tpu_custom_call.1} parent=1 // pred_check_branch
      %87 = sbr.rel (0) target = $region41
    $region40: #{tpu_custom_call.1} parent=1 // pred_region
      %88 = dma.done [#allocation9], 1024
    $region41: #{tpu_custom_call.1} parent=1 // pred_fallthru
      _
    // Predicated region
    $region42: #{tpu_custom_call.1} parent=1 // pred_check
      _
    $region43: #{tpu_custom_call.1} parent=1 // pred_check_branch
      %90 = sbr.rel (0) target = $region45
    $region44: #{tpu_custom_call.1} parent=1 // pred_region
      %91 = dma.done [#allocation9], 1024
    $region45: #{tpu_custom_call.1} parent=1 // pred_fallthru
      _
    %v93 = vld [vmem:[%s5] sm:$0xff]
    %v94 = vld [vmem:[#allocation2] sm:$0xff]
    %v95 = vld [vmem:[#allocation2 + $0x8] sm:$0xff]
    %v96 = vld [vmem:[#allocation2 + $0x10] sm:$0xf]
    %v97 = vpack.c.bf16 %v95, %v94
    %v98 = vpack.c.bf16 %v96, %v96
    %v99 = vld [vmem:[#allocation5] sm:$0xf]
    %v100 = vld [vmem:[#allocation5 + $0x4] sm:$0xf]
    %v101 = vld [vmem:[#allocation5 + $0x8] sm:$0xf]
    %v102 = vld [vmem:[#allocation5 + $0xc] sm:$0xf]
    %v103 = vld [vmem:[#allocation5 + $0x10] sm:$0xf]
    %v104 = vld [vmem:[#allocation5 + $0x14] sm:$0xf]
    %v105 = vld [vmem:[#allocation5 + $0x18] sm:$0xf]
    %v106 = vld [vmem:[#allocation5 + $0x1c] sm:$0xf]
    %v107 = vld [vmem:[#allocation5 + $0x20] sm:$0xf]
    %v108 = vld [vmem:[#allocation5 + $0x24] sm:$0xf]
    %v109 = vld [vmem:[#allocation5 + $0x28] sm:$0xf]
    %v110 = vld [vmem:[#allocation5 + $0x2c] sm:$0xf]
    %v111 = vld [vmem:[#allocation5 + $0x30] sm:$0xf]
    %v112 = vld [vmem:[#allocation5 + $0x34] sm:$0xf]
    %v113 = vld [vmem:[#allocation5 + $0x38] sm:$0xf]
    %v114 = vld [vmem:[#allocation5 + $0x3c] sm:$0xf]
    %v131 = vunpack.c.l.b16 %v99
    %v132 = vunpack.c.l.b16 %v100
    %v133 = vunpack.c.l.b16 %v101
    %v134 = vunpack.c.l.b16 %v102
    %v135 = vunpack.c.l.b16 %v103
    %v136 = vunpack.c.l.b16 %v104
    %v137 = vunpack.c.l.b16 %v105
    %v138 = vunpack.c.l.b16 %v106
    %v139 = vunpack.c.l.b16 %v107
    %v140 = vunpack.c.l.b16 %v108
    %v141 = vunpack.c.l.b16 %v109
    %v142 = vunpack.c.l.b16 %v110
    %v143 = vunpack.c.l.b16 %v111
    %v144 = vunpack.c.l.b16 %v112
    %v145 = vunpack.c.l.b16 %v113
    %v146 = vunpack.c.l.b16 %v114
    %v147 = vpack.c.b16 %v132, %v131
    %v148 = vpack.c.b16 %v134, %v133
    %v149 = vpack.c.b16 %v136, %v135
    %v150 = vpack.c.b16 %v138, %v137
    %v151 = vpack.c.b16 %v140, %v139
    %v152 = vpack.c.b16 %v142, %v141
    %v153 = vpack.c.b16 %v144, %v143
    %v154 = vpack.c.b16 %v146, %v145
    %163 = vmatprep.subr.bf16.mxu0 0
    %164 = vmatpush1.bf16.msra.mxu0 %v147
    %165 = vmatprep.subr.bf16.mxu0 0
    %166 = vmatpush1.bf16.msra.mxu0 %v148
    %167 = vmatprep.subr.bf16.mxu0 0
    %168 = vmatpush1.bf16.msra.mxu0 %v149
    %169 = vmatprep.subr.bf16.mxu0 0
    %170 = vmatpush1.bf16.msra.mxu0 %v150
    %171 = vmatprep.subr.bf16.mxu0 0
    %172 = vmatpush1.bf16.msra.mxu0 %v151
    %173 = vmatprep.subr.bf16.mxu0 0
    %174 = vmatpush1.bf16.msra.mxu0 %v152
    %175 = vmatprep.subr.bf16.mxu0 0
    %176 = vmatpush1.bf16.msra.mxu0 %v153
    %177 = vmatprep.subr.bf16.mxu0 0
    %178 = vmatpush1.bf16.msra.mxu0 %v154
    %179 = vmatprep.subr.bf16.mxu0 0
    %180 = vmatpush1.bf16.msra.mxu0 0
    %181 = vmatprep.subr.bf16.mxu0 0
    %182 = vmatpush1.bf16.msra.mxu0 0
    %183 = vmatprep.subr.bf16.mxu0 0
    %184 = vmatpush1.bf16.msra.mxu0 0
    %185 = vmatprep.subr.bf16.mxu0 0
    %186 = vmatpush1.bf16.msra.mxu0 0
    %187 = vmatprep.subr.bf16.mxu0 0
    %188 = vmatpush1.bf16.msra.mxu0 0
    %189 = vmatprep.subr.bf16.mxu0 0
    %190 = vmatpush1.bf16.msra.mxu0 0
    %191 = vmatprep.subr.bf16.mxu0 0
    %192 = vmatpush1.bf16.msra.mxu0 0
    %193 = vmatprep.subr.bf16.mxu0 0
    %194 = vmatpush1.bf16.msra.mxu0 0
    %195 = vmatprep.mubr.bf16.mxu0 0
    %196 = vmatmul.mubr.bf16.gmra.mrb[0].mxu0 %v97
    %v197 = vpop.f32.mrb[0].mxu0
    %v198 = vadd.f32 0.0, %v197
    %v199 = vpop.f32.mrb[0].mxu0
    %v200 = vpop.f32.mrb[0].mxu0
    %v201 = vadd.f32 0.0, %v200
    %v202 = vpop.f32.mrb[0].mxu0
    %203 = vmatprep.mubr.bf16.mxu0 0
    %204 = vmatmul.mubr.bf16.gmra.mrb[0].mxu0 %v98
    %v205 = vpop.f32.mrb[0].mxu0
    %v206 = vadd.f32 0.0, %v205
    %v207 = vpop.f32.mrb[0].mxu0
    %v208 = vpop.f32.mrb[0].mxu0
    %v209 = vpop.f32.mrb[0].mxu0
    %210 = vdwg.mxu0
    %v211 = vadd.f32 %v198, %v201
    %vm212 = vcmask 1043456
    %v213 = vsel %vm212, %v206, 0.0
    %v214 = vadd.f32 %v211, %v213
    %v215 = vrot.slane %v214, 4
    %v216 = vadd.f32 %v214, %v215
    %v217 = vrot.slane %v216, 2
    %v218 = vadd.f32 %v216, %v217
    %v219 = vrot.slane %v218, 1
    %v220 = vadd.f32 %v218, %v219
    %v221 = vmul.f32 %v220, 0.05
    %v222 = vmul.f32 %v198, %v198
    %v223 = vmul.f32 %v201, %v201
    %v224 = vmul.f32 %v206, %v206
    %v225 = vadd.f32 %v222, %v223
    %v226 = vsel %vm212, %v224, 0.0
    %v227 = vadd.f32 %v225, %v226
    %v228 = vrot.slane %v227, 4
    %v229 = vadd.f32 %v227, %v228
    %v230 = vrot.slane %v229, 2
    %v231 = vadd.f32 %v229, %v230
    %v232 = vrot.slane %v231, 1
    %v233 = vadd.f32 %v231, %v232
    %v234 = vmul.f32 %v233, 0.05
    %v235 = vmul.f32 %v221, %v221
    %v236 = vsub.f32 %v234, %v235
    %v237 = vmax.f32 %v236, 0.0
    %v238 = vsub.f32 %v198, %v221
    %v239 = vsub.f32 %v201, %v221
    %v240 = vsub.f32 %v206, %v221
    %v241 = vadd.f32 %v237, 1e-05
    %v242 = vrsqrt.pop %v241
    %v243 = vmul.f32 %v238, %v242
    %v244 = vmul.f32 %v239, %v242
    %v245 = vmul.f32 %v240, %v242
    %v246 = vlaneseq
    %v247 = vshrl.u32 %v246, 7
    %v248 = vsub.s32 0, %v247
    %v249 = vrot.slane %v93, %v248
    %v250 = vmul.f32 %v243, %v249
    %v251 = vmul.f32 %v244, %v249
    %v252 = vmul.f32 %v245, %v249
    %v253 = vlaneseq
    %v254 = vshrl.u32 %v253, 7
    %v255 = vsub.s32 1, %v254
    %v256 = vrot.slane %v93, %v255
    %v257 = vadd.f32 %v250, %v256
    %v258 = vadd.f32 %v251, %v256
    %v259 = vadd.f32 %v252, %v256
    %v260 = vmax.f32 %v257, 0.0
    %v261 = vmax.f32 %v258, 0.0
    %v262 = vmax.f32 %v259, 0.0
    %v263 = vpack.c.bf16 %v261, %v260
    %v264 = vpack.c.bf16 %v262, %v262
    %v265 = vld [vmem:[#allocation7] sm:$0xf]
    %v266 = vld [vmem:[#allocation7 + $0x4] sm:$0xf]
    %v267 = vld [vmem:[#allocation7 + $0x8] sm:$0xf]
    %v268 = vld [vmem:[#allocation7 + $0xc] sm:$0xf]
    %v269 = vld [vmem:[#allocation7 + $0x10] sm:$0xf]
    %v270 = vld [vmem:[#allocation7 + $0x14] sm:$0xf]
    %v271 = vld [vmem:[#allocation7 + $0x18] sm:$0xf]
    %v272 = vld [vmem:[#allocation7 + $0x1c] sm:$0xf]
    %v273 = vld [vmem:[#allocation7 + $0x20] sm:$0xf]
    %v274 = vld [vmem:[#allocation7 + $0x24] sm:$0xf]
    %v275 = vld [vmem:[#allocation7 + $0x28] sm:$0xf]
    %v276 = vld [vmem:[#allocation7 + $0x2c] sm:$0xf]
    %v277 = vld [vmem:[#allocation7 + $0x30] sm:$0xf]
    %v278 = vld [vmem:[#allocation7 + $0x34] sm:$0xf]
    %v279 = vld [vmem:[#allocation7 + $0x38] sm:$0xf]
    %v280 = vld [vmem:[#allocation7 + $0x3c] sm:$0xf]
    %v297 = vunpack.c.l.b16 %v265
    %v298 = vunpack.c.l.b16 %v266
    %v299 = vunpack.c.l.b16 %v267
    %v300 = vunpack.c.l.b16 %v268
    %v301 = vunpack.c.l.b16 %v269
    %v302 = vunpack.c.l.b16 %v270
    %v303 = vunpack.c.l.b16 %v271
    %v304 = vunpack.c.l.b16 %v272
    %v305 = vunpack.c.l.b16 %v273
    %v306 = vunpack.c.l.b16 %v274
    %v307 = vunpack.c.l.b16 %v275
    %v308 = vunpack.c.l.b16 %v276
    %v309 = vunpack.c.l.b16 %v277
    %v310 = vunpack.c.l.b16 %v278
    %v311 = vunpack.c.l.b16 %v279
    %v312 = vunpack.c.l.b16 %v280
    %v313 = vpack.c.b16 %v298, %v297
    %v314 = vpack.c.b16 %v300, %v299
    %v315 = vpack.c.b16 %v302, %v301
    %v316 = vpack.c.b16 %v304, %v303
    %v317 = vpack.c.b16 %v306, %v305
    %v318 = vpack.c.b16 %v308, %v307
    %v319 = vpack.c.b16 %v310, %v309
    %v320 = vpack.c.b16 %v312, %v311
    %329 = vmatprep.subr.bf16.mxu0 0
    %330 = vmatpush1.bf16.msra.mxu0 %v313
    %331 = vmatprep.subr.bf16.mxu0 0
    %332 = vmatpush1.bf16.msra.mxu0 %v314
    %333 = vmatprep.subr.bf16.mxu0 0
    %334 = vmatpush1.bf16.msra.mxu0 %v315
    %335 = vmatprep.subr.bf16.mxu0 0
    %336 = vmatpush1.bf16.msra.mxu0 %v316
    %337 = vmatprep.subr.bf16.mxu0 0
    %338 = vmatpush1.bf16.msra.mxu0 %v317
    %339 = vmatprep.subr.bf16.mxu0 0
    %340 = vmatpush1.bf16.msra.mxu0 %v318
    %341 = vmatprep.subr.bf16.mxu0 0
    %342 = vmatpush1.bf16.msra.mxu0 %v319
    %343 = vmatprep.subr.bf16.mxu0 0
    %344 = vmatpush1.bf16.msra.mxu0 %v320
    %345 = vmatprep.subr.bf16.mxu0 0
    %346 = vmatpush1.bf16.msra.mxu0 0
    %347 = vmatprep.subr.bf16.mxu0 0
    %348 = vmatpush1.bf16.msra.mxu0 0
    %349 = vmatprep.subr.bf16.mxu0 0
    %350 = vmatpush1.bf16.msra.mxu0 0
    %351 = vmatprep.subr.bf16.mxu0 0
    %352 = vmatpush1.bf16.msra.mxu0 0
    %353 = vmatprep.subr.bf16.mxu0 0
    %354 = vmatpush1.bf16.msra.mxu0 0
    %355 = vmatprep.subr.bf16.mxu0 0
    %356 = vmatpush1.bf16.msra.mxu0 0
    %357 = vmatprep.subr.bf16.mxu0 0
    %358 = vmatpush1.bf16.msra.mxu0 0
    %359 = vmatprep.subr.bf16.mxu0 0
    %360 = vmatpush1.bf16.msra.mxu0 0
    %361 = vmatprep.mubr.bf16.mxu0 0
    %362 = vmatmul.mubr.bf16.gmra.mrb[0].mxu0 %v263
    %v363 = vpop.f32.mrb[0].mxu0
    %v364 = vadd.f32 0.0, %v363
    %v365 = vpop.f32.mrb[0].mxu0
    %v366 = vpop.f32.mrb[0].mxu0
    %v367 = vadd.f32 0.0, %v366
    %v368 = vpop.f32.mrb[0].mxu0
    %369 = vmatprep.mubr.bf16.mxu0 0
    %370 = vmatmul.mubr.bf16.gmra.mrb[0].mxu0 %v264
    %v371 = vpop.f32.mrb[0].mxu0
    %v372 = vadd.f32 0.0, %v371
    %v373 = vpop.f32.mrb[0].mxu0
    %v374 = vpop.f32.mrb[0].mxu0
    %v375 = vpop.f32.mrb[0].mxu0
    %376 = vdwg.mxu0
    %v377 = vadd.f32 %v364, %v367
    %v378 = vsel %vm212, %v372, 0.0
    %v379 = vadd.f32 %v377, %v378
    %v380 = vrot.slane %v379, 4
    %v381 = vadd.f32 %v379, %v380
    %v382 = vrot.slane %v381, 2
    %v383 = vadd.f32 %v381, %v382
    %v384 = vrot.slane %v383, 1
    %v385 = vadd.f32 %v383, %v384
    %v386 = vmul.f32 %v385, 0.05
    %v387 = vmul.f32 %v364, %v364
    %v388 = vmul.f32 %v367, %v367
    %v389 = vmul.f32 %v372, %v372
    %v390 = vadd.f32 %v387, %v388
    %v391 = vsel %vm212, %v389, 0.0
    %v392 = vadd.f32 %v390, %v391
    %v393 = vrot.slane %v392, 4
    %v394 = vadd.f32 %v392, %v393
    %v395 = vrot.slane %v394, 2
    %v396 = vadd.f32 %v394, %v395
    %v397 = vrot.slane %v396, 1
    %v398 = vadd.f32 %v396, %v397
    %v399 = vmul.f32 %v398, 0.05
    %v400 = vmul.f32 %v386, %v386
    %v401 = vsub.f32 %v399, %v400
    %v402 = vmax.f32 %v401, 0.0
    %v403 = vsub.f32 %v364, %v386
    %v404 = vsub.f32 %v367, %v386
    %v405 = vsub.f32 %v372, %v386
    %v406 = vadd.f32 %v402, 1e-05
    %v407 = vrsqrt.pop %v406
    %v408 = vmul.f32 %v403, %v407
    %v409 = vmul.f32 %v404, %v407
    %v410 = vmul.f32 %v405, %v407
    %v411 = vlaneseq
    %v412 = vshrl.u32 %v411, 7
    %v413 = vsub.s32 2, %v412
    %v414 = vrot.slane %v93, %v413
    %v415 = vmul.f32 %v408, %v414
    %v416 = vmul.f32 %v409, %v414
    %v417 = vmul.f32 %v410, %v414
    %v418 = vlaneseq
    %v419 = vshrl.u32 %v418, 7
    %v420 = vsub.s32 3, %v419
    %v421 = vrot.slane %v93, %v420
    %v422 = vadd.f32 %v415, %v421
    %v423 = vadd.f32 %v416, %v421
    %v424 = vadd.f32 %v417, %v421
    %v425 = vmax.f32 %v422, 0.0
    %v426 = vmax.f32 %v423, 0.0
    %v427 = vmax.f32 %v424, 0.0
    %v428 = vpack.c.bf16 %v426, %v425
    %v429 = vpack.c.bf16 %v427, %v427
    %v430 = vld [vmem:[#allocation8] sm:$0xf]
    %v431 = vld [vmem:[#allocation8 + $0x4] sm:$0xf]
    %v432 = vld [vmem:[#allocation8 + $0x8] sm:$0xf]
    %v433 = vld [vmem:[#allocation8 + $0xc] sm:$0xf]
    %v434 = vld [vmem:[#allocation8 + $0x10] sm:$0xf]
    %v435 = vld [vmem:[#allocation8 + $0x14] sm:$0xf]
    %v436 = vld [vmem:[#allocation8 + $0x18] sm:$0xf]
    %v437 = vld [vmem:[#allocation8 + $0x1c] sm:$0xf]
    %v438 = vld [vmem:[#allocation8 + $0x20] sm:$0xf]
    %v439 = vld [vmem:[#allocation8 + $0x24] sm:$0xf]
    %v440 = vld [vmem:[#allocation8 + $0x28] sm:$0xf]
    %v441 = vld [vmem:[#allocation8 + $0x2c] sm:$0xf]
    %v442 = vld [vmem:[#allocation8 + $0x30] sm:$0xf]
    %v443 = vld [vmem:[#allocation8 + $0x34] sm:$0xf]
    %v444 = vld [vmem:[#allocation8 + $0x38] sm:$0xf]
    %v445 = vld [vmem:[#allocation8 + $0x3c] sm:$0xf]
    %v462 = vunpack.c.l.b16 %v430
    %v463 = vunpack.c.l.b16 %v431
    %v464 = vunpack.c.l.b16 %v432
    %v465 = vunpack.c.l.b16 %v433
    %v466 = vunpack.c.l.b16 %v434
    %v467 = vunpack.c.l.b16 %v435
    %v468 = vunpack.c.l.b16 %v436
    %v469 = vunpack.c.l.b16 %v437
    %v470 = vunpack.c.l.b16 %v438
    %v471 = vunpack.c.l.b16 %v439
    %v472 = vunpack.c.l.b16 %v440
    %v473 = vunpack.c.l.b16 %v441
    %v474 = vunpack.c.l.b16 %v442
    %v475 = vunpack.c.l.b16 %v443
    %v476 = vunpack.c.l.b16 %v444
    %v477 = vunpack.c.l.b16 %v445
    %v478 = vpack.c.b16 %v463, %v462
    %v479 = vpack.c.b16 %v465, %v464
    %v480 = vpack.c.b16 %v467, %v466
    %v481 = vpack.c.b16 %v469, %v468
    %v482 = vpack.c.b16 %v471, %v470
    %v483 = vpack.c.b16 %v473, %v472
    %v484 = vpack.c.b16 %v475, %v474
    %v485 = vpack.c.b16 %v477, %v476
    %494 = vmatprep.subr.bf16.mxu0 0
    %495 = vmatpush1.bf16.msra.mxu0 %v478
    %496 = vmatprep.subr.bf16.mxu0 0
    %497 = vmatpush1.bf16.msra.mxu0 %v479
    %498 = vmatprep.subr.bf16.mxu0 0
    %499 = vmatpush1.bf16.msra.mxu0 %v480
    %500 = vmatprep.subr.bf16.mxu0 0
    %501 = vmatpush1.bf16.msra.mxu0 %v481
    %502 = vmatprep.subr.bf16.mxu0 0
    %503 = vmatpush1.bf16.msra.mxu0 %v482
    %504 = vmatprep.subr.bf16.mxu0 0
    %505 = vmatpush1.bf16.msra.mxu0 %v483
    %506 = vmatprep.subr.bf16.mxu0 0
    %507 = vmatpush1.bf16.msra.mxu0 %v484
    %508 = vmatprep.subr.bf16.mxu0 0
    %509 = vmatpush1.bf16.msra.mxu0 %v485
    %510 = vmatprep.subr.bf16.mxu0 0
    %511 = vmatpush1.bf16.msra.mxu0 0
    %512 = vmatprep.subr.bf16.mxu0 0
    %513 = vmatpush1.bf16.msra.mxu0 0
    %514 = vmatprep.subr.bf16.mxu0 0
    %515 = vmatpush1.bf16.msra.mxu0 0
    %516 = vmatprep.subr.bf16.mxu0 0
    %517 = vmatpush1.bf16.msra.mxu0 0
    %518 = vmatprep.subr.bf16.mxu0 0
    %519 = vmatpush1.bf16.msra.mxu0 0
    %520 = vmatprep.subr.bf16.mxu0 0
    %521 = vmatpush1.bf16.msra.mxu0 0
    %522 = vmatprep.subr.bf16.mxu0 0
    %523 = vmatpush1.bf16.msra.mxu0 0
    %524 = vmatprep.subr.bf16.mxu0 0
    %525 = vmatpush1.bf16.msra.mxu0 0
    %526 = vmatprep.mubr.bf16.mxu0 0
    %527 = vmatmul.mubr.bf16.gmra.mrb[0].mxu0 %v428
    %v528 = vpop.f32.mrb[0].mxu0
    %v529 = vadd.f32 0.0, %v528
    %v530 = vpop.f32.mrb[0].mxu0
    %v531 = vpop.f32.mrb[0].mxu0
    %v532 = vadd.f32 0.0, %v531
    %v533 = vpop.f32.mrb[0].mxu0
    %534 = vmatprep.mubr.bf16.mxu0 0
    %535 = vmatmul.mubr.bf16.gmra.mrb[0].mxu0 %v429
    %v536 = vpop.f32.mrb[0].mxu0
    %v537 = vadd.f32 0.0, %v536
    %v538 = vpop.f32.mrb[0].mxu0
    %v539 = vpop.f32.mrb[0].mxu0
    %v540 = vpop.f32.mrb[0].mxu0
    %541 = vdwg.mxu0
    %v542 = vadd.f32 %v529, %v532
    %v543 = vsel %vm212, %v537, 0.0
    %v544 = vadd.f32 %v542, %v543
    %v545 = vrot.slane %v544, 4
    %v546 = vadd.f32 %v544, %v545
    %v547 = vrot.slane %v546, 2
    %v548 = vadd.f32 %v546, %v547
    %v549 = vrot.slane %v548, 1
    %v550 = vadd.f32 %v548, %v549
    %v551 = vmul.f32 %v550, 0.05
    %v552 = vmul.f32 %v529, %v529
    %v553 = vmul.f32 %v532, %v532
    %v554 = vmul.f32 %v537, %v537
    %v555 = vadd.f32 %v552, %v553
    %v556 = vsel %vm212, %v554, 0.0
    %v557 = vadd.f32 %v555, %v556
    %v558 = vrot.slane %v557, 4
    %v559 = vadd.f32 %v557, %v558
    %v560 = vrot.slane %v559, 2
    %v561 = vadd.f32 %v559, %v560
    %v562 = vrot.slane %v561, 1
    %v563 = vadd.f32 %v561, %v562
    %v564 = vmul.f32 %v563, 0.05
    %v565 = vmul.f32 %v551, %v551
    %v566 = vsub.f32 %v564, %v565
    %v567 = vmax.f32 %v566, 0.0
    %v568 = vsub.f32 %v529, %v551
    %v569 = vsub.f32 %v532, %v551
    %v570 = vsub.f32 %v537, %v551
    %v571 = vadd.f32 %v567, 1e-05
    %v572 = vrsqrt.pop %v571
    %v573 = vmul.f32 %v568, %v572
    %v574 = vmul.f32 %v569, %v572
    %v575 = vmul.f32 %v570, %v572
    %v576 = vlaneseq
    %v577 = vshrl.u32 %v576, 7
    %v578 = vsub.s32 4, %v577
    %v579 = vrot.slane %v93, %v578
    %v580 = vmul.f32 %v573, %v579
    %v581 = vmul.f32 %v574, %v579
    %v582 = vmul.f32 %v575, %v579
    %v583 = vlaneseq
    %v584 = vshrl.u32 %v583, 7
    %v585 = vsub.s32 5, %v584
    %v586 = vrot.slane %v93, %v585
    %v587 = vadd.f32 %v580, %v586
    %v588 = vadd.f32 %v581, %v586
    %v589 = vadd.f32 %v582, %v586
    %v590 = vmax.f32 %v587, 0.0
    %v591 = vmax.f32 %v588, 0.0
    %v592 = vmax.f32 %v589, 0.0
    %v593 = vpack.c.bf16 %v591, %v590
    %v594 = vpack.c.bf16 %v592, %v592
    %v595 = vld [vmem:[#allocation10] sm:$0xf]
    %v596 = vld [vmem:[#allocation10 + $0x4] sm:$0xf]
    %v597 = vld [vmem:[#allocation10 + $0x8] sm:$0xf]
    %v598 = vld [vmem:[#allocation10 + $0xc] sm:$0xf]
    %v599 = vld [vmem:[#allocation10 + $0x10] sm:$0xf]
    %v600 = vld [vmem:[#allocation10 + $0x14] sm:$0xf]
    %v601 = vld [vmem:[#allocation10 + $0x18] sm:$0xf]
    %v602 = vld [vmem:[#allocation10 + $0x1c] sm:$0xf]
    %v603 = vld [vmem:[#allocation10 + $0x20] sm:$0xf]
    %v604 = vld [vmem:[#allocation10 + $0x24] sm:$0xf]
    %v605 = vld [vmem:[#allocation10 + $0x28] sm:$0xf]
    %v606 = vld [vmem:[#allocation10 + $0x2c] sm:$0xf]
    %v607 = vld [vmem:[#allocation10 + $0x30] sm:$0xf]
    %v608 = vld [vmem:[#allocation10 + $0x34] sm:$0xf]
    %v609 = vld [vmem:[#allocation10 + $0x38] sm:$0xf]
    %v610 = vld [vmem:[#allocation10 + $0x3c] sm:$0xf]
    %v627 = vunpack.c.l.b16 %v595
    %v628 = vunpack.c.l.b16 %v596
    %v629 = vunpack.c.l.b16 %v597
    %v630 = vunpack.c.l.b16 %v598
    %v631 = vunpack.c.l.b16 %v599
    %v632 = vunpack.c.l.b16 %v600
    %v633 = vunpack.c.l.b16 %v601
    %v634 = vunpack.c.l.b16 %v602
    %v635 = vunpack.c.l.b16 %v603
    %v636 = vunpack.c.l.b16 %v604
    %v637 = vunpack.c.l.b16 %v605
    %v638 = vunpack.c.l.b16 %v606
    %v639 = vunpack.c.l.b16 %v607
    %v640 = vunpack.c.l.b16 %v608
    %v641 = vunpack.c.l.b16 %v609
    %v642 = vunpack.c.l.b16 %v610
    %v643 = vpack.c.b16 %v628, %v627
    %v644 = vpack.c.b16 %v630, %v629
    %v645 = vpack.c.b16 %v632, %v631
    %v646 = vpack.c.b16 %v634, %v633
    %v647 = vpack.c.b16 %v636, %v635
    %v648 = vpack.c.b16 %v638, %v637
    %v649 = vpack.c.b16 %v640, %v639
    %v650 = vpack.c.b16 %v642, %v641
    %659 = vmatprep.subr.bf16.mxu0 0
    %660 = vmatpush1.bf16.msra.mxu0 %v643
    %661 = vmatprep.subr.bf16.mxu0 0
    %662 = vmatpush1.bf16.msra.mxu0 %v644
    %663 = vmatprep.subr.bf16.mxu0 0
    %664 = vmatpush1.bf16.msra.mxu0 %v645
    %665 = vmatprep.subr.bf16.mxu0 0
    %666 = vmatpush1.bf16.msra.mxu0 %v646
    %667 = vmatprep.subr.bf16.mxu0 0
    %668 = vmatpush1.bf16.msra.mxu0 %v647
    %669 = vmatprep.subr.bf16.mxu0 0
    %670 = vmatpush1.bf16.msra.mxu0 %v648
    %671 = vmatprep.subr.bf16.mxu0 0
    %672 = vmatpush1.bf16.msra.mxu0 %v649
    %673 = vmatprep.subr.bf16.mxu0 0
    %674 = vmatpush1.bf16.msra.mxu0 %v650
    %675 = vmatprep.subr.bf16.mxu0 0
    %676 = vmatpush1.bf16.msra.mxu0 0
    %677 = vmatprep.subr.bf16.mxu0 0
    %678 = vmatpush1.bf16.msra.mxu0 0
    %679 = vmatprep.subr.bf16.mxu0 0
    %680 = vmatpush1.bf16.msra.mxu0 0
    %681 = vmatprep.subr.bf16.mxu0 0
    %682 = vmatpush1.bf16.msra.mxu0 0
    %683 = vmatprep.subr.bf16.mxu0 0
    %684 = vmatpush1.bf16.msra.mxu0 0
    %685 = vmatprep.subr.bf16.mxu0 0
    %686 = vmatpush1.bf16.msra.mxu0 0
    %687 = vmatprep.subr.bf16.mxu0 0
    %688 = vmatpush1.bf16.msra.mxu0 0
    %689 = vmatprep.subr.bf16.mxu0 0
    %690 = vmatpush1.bf16.msra.mxu0 0
    %691 = vmatprep.mubr.bf16.mxu0 0
    %692 = vmatmul.mubr.bf16.gmra.mrb[0].mxu0 %v593
    %v693 = vpop.f32.mrb[0].mxu0
    %v694 = vadd.f32 0.0, %v693
    %v695 = vpop.f32.mrb[0].mxu0
    %v696 = vpop.f32.mrb[0].mxu0
    %v697 = vadd.f32 0.0, %v696
    %v698 = vpop.f32.mrb[0].mxu0
    %699 = vmatprep.mubr.bf16.mxu0 0
    %700 = vmatmul.mubr.bf16.gmra.mrb[0].mxu0 %v594
    %v701 = vpop.f32.mrb[0].mxu0
    %v702 = vadd.f32 0.0, %v701
    %v703 = vpop.f32.mrb[0].mxu0
    %v704 = vpop.f32.mrb[0].mxu0
    %v705 = vpop.f32.mrb[0].mxu0
    %706 = vdwg.mxu0
    %v707 = vadd.f32 %v694, %v697
    %v708 = vsel %vm212, %v702, 0.0
    %v709 = vadd.f32 %v707, %v708
    %v710 = vrot.slane %v709, 4
    %v711 = vadd.f32 %v709, %v710
    %v712 = vrot.slane %v711, 2
    %v713 = vadd.f32 %v711, %v712
    %v714 = vrot.slane %v713, 1
    %v715 = vadd.f32 %v713, %v714
    %v716 = vmul.f32 %v715, 0.05
    %v717 = vmul.f32 %v694, %v694
    %v718 = vmul.f32 %v697, %v697
    %v719 = vmul.f32 %v702, %v702
    %v720 = vadd.f32 %v717, %v718
    %v721 = vsel %vm212, %v719, 0.0
    %v722 = vadd.f32 %v720, %v721
    %v723 = vrot.slane %v722, 4
    %v724 = vadd.f32 %v722, %v723
    %v725 = vrot.slane %v724, 2
    %v726 = vadd.f32 %v724, %v725
    %v727 = vrot.slane %v726, 1
    %v728 = vadd.f32 %v726, %v727
    %v729 = vmul.f32 %v728, 0.05
    %v730 = vmul.f32 %v716, %v716
    %v731 = vsub.f32 %v729, %v730
    %v732 = vmax.f32 %v731, 0.0
    %v733 = vsub.f32 %v694, %v716
    %v734 = vsub.f32 %v697, %v716
    %v735 = vsub.f32 %v702, %v716
    %v736 = vadd.f32 %v732, 1e-05
    %v737 = vrsqrt.pop %v736
    %v738 = vmul.f32 %v733, %v737
    %v739 = vmul.f32 %v734, %v737
    %v740 = vmul.f32 %v735, %v737
    %v741 = vlaneseq
    %v742 = vshrl.u32 %v741, 7
    %v743 = vsub.s32 6, %v742
    %v744 = vrot.slane %v93, %v743
    %v745 = vmul.f32 %v738, %v744
    %v746 = vmul.f32 %v739, %v744
    %v747 = vmul.f32 %v740, %v744
    %v748 = vlaneseq
    %v749 = vshrl.u32 %v748, 7
    %v750 = vsub.s32 7, %v749
    %v751 = vrot.slane %v93, %v750
    %v752 = vadd.f32 %v745, %v751
    %v753 = vadd.f32 %v746, %v751
    %v754 = vadd.f32 %v747, %v751
    %v755 = vtanh.pop %v752
    %v756 = vtanh.pop %v753
    %v757 = vtanh.pop %v754
    %758 = vst [vmem:[#allocation11] sm:$0xff] %v755
    %759 = vst [vmem:[#allocation11 + $0x8] sm:$0xff] %v756
    %760 = vst [vmem:[#allocation11 + $0x10] sm:$0xf] %v757
    // Predicated region
    $region46: #{tpu_custom_call.1} parent=1 // pred_check
      _
    $region47: #{tpu_custom_call.1} parent=1 // pred_check_branch
      %762 = sbr.rel (0) target = $region49
    $region48: #{tpu_custom_call.1} parent=1 // pred_region
      %s764 = ssub.s32 384, 384
      %765 = vsyncadd [#allocation4], %s764
      %s766 = sshll.u32 [#allocation11], 4
      %s767 = int_to_ptr.vmem [resolvable:$true] %s766
      %772 = dma.vmem_to_hbm [thread:$0]  %s767, 384, %s6, [#allocation4], 128, 128, 8
    $region49: #{tpu_custom_call.1} parent=1 // pred_fallthru
      _
    // Predicated region
    $region50: #{tpu_custom_call.1} parent=1 // pred_check
      _
    $region51: #{tpu_custom_call.1} parent=1 // pred_check_branch
      %774 = sbr.rel (0) target = $region53
    $region52: #{tpu_custom_call.1} parent=1 // pred_region
      %775 = dma.done [#allocation4], 384
    $region53: #{tpu_custom_call.1} parent=1 // pred_fallthru
      _
    %776 = vsyncpa [#allocation3], 1
    %777 = vsyncpa [#allocation6], 1
    %778 = vsyncpa [#allocation9], 1
    %779 = vsyncpa [#allocation4], 1

</llo_original>
